<compile_context>
chip_gen: v7x
topology: tpu7x:2x2x1
jax: 0.10.0
libtpu: 0.0.40
codegen_flags: <defaults>
</compile_context>

<pallas_src>
import functools

import jax
import jax.numpy as jnp
from jax.experimental import pallas as pl
from jax.experimental.pallas import tpu as pltpu

IN_DIM = 6
OUT_DIM = 16          # fc5 output width (2 * 8)
LAYER_DIMS = [(6, 128), (128, 64), (64, 32), (32, 16), (16, OUT_DIM)]


def _round_up(n: int, m: int) -> int:
    return ((n + m - 1) // m) * m


# ----------------------------- kernel ------------------------------------- #
def encoder_kernel(x_ref,
                   w1_ref, b1_ref,
                   w2_ref, b2_ref,
                   w3_ref, b3_ref,
                   w4_ref, b4_ref,
                   w5_ref, b5_ref,
                   o_ref, *, compute_dtype):
    """One batch tile: 5 back-to-back matmuls, ReLU on the first four."""

    def layer(h, w_ref, b_ref, relu):
        # MXU matmul with f32 accumulation; bias add / ReLU stay in f32
        # (v5e has no bf16 VPU path, and it is free filler under MXU anyway).
        y = jnp.dot(h.astype(compute_dtype), w_ref[...],
                    preferred_element_type=jnp.float32) + b_ref[...]
        return jnp.maximum(y, 0.0) if relu else y

    h = x_ref[...]                       # already bf16 when use_bf16_matmul
    h = layer(h, w1_ref, b1_ref, True)
    h = layer(h, w2_ref, b2_ref, True)
    h = layer(h, w3_ref, b3_ref, True)
    h = layer(h, w4_ref, b4_ref, True)
    h = layer(h, w5_ref, b5_ref, False)  # (tm, 16)
    o_ref[...] = h.astype(o_ref.dtype)


# ----------------------------- wrapper ------------------------------------ #
@functools.partial(jax.jit, static_argnames=("block_m", "use_bf16_matmul"))
def encoder_forward(x, params, *, block_m=2048, use_bf16_matmul=True):
    """x: (B, 6) float32. params: dict of (w_i, b_i) with w_i (in, out), b_i (1, out)."""
    B, F = x.shape
    compute_dtype = jnp.bfloat16 if use_bf16_matmul else jnp.float32

    weights = [params[f"w{i}"] for i in range(1, 6)]
    biases = [params[f"b{i}"] for i in range(1, 6)]
    if use_bf16_matmul:
        # Downcast MXU inputs once in the wrapper; biases stay f32.
        weights = [w.astype(jnp.bfloat16) for w in weights]
        x = x.astype(jnp.bfloat16)

    # Tile size: multiple of 8 sublanes, at least 2 grid steps when B > 8 so
    # both v7x TensorCores get work, capped at block_m (<= 2048 keeps the tile
    # well inside every generation's default scoped VMEM).
    tm = min(block_m, max(8, _round_up(pl.cdiv(B, 2), 8)))
    grid = (pl.cdiv(B, tm),)   # ragged last block handled by Pallas

    def resident_spec(arr):
        # Full-array block with a constant index_map -> stays VMEM-resident
        # across grid steps while x/out tiles are pipelined.
        return pl.BlockSpec(arr.shape, lambda i, _n=arr.ndim: (0,) * _n)

    in_specs = [pl.BlockSpec((tm, F), lambda i: (i, 0))]
    flat_args = [x]
    for w, b in zip(weights, biases):
        in_specs.append(resident_spec(w))
        in_specs.append(resident_spec(b))
        flat_args.append(w)
        flat_args.append(b)

    out_specs = pl.BlockSpec((tm, OUT_DIM), lambda i: (i, 0))

    flops = 2 * B * sum(fi * fo for fi, fo in LAYER_DIMS)
    bytes_accessed = (B * F * x.dtype.itemsize
                      + B * OUT_DIM * 4
                      + sum(w.size * w.dtype.itemsize for w in weights)
                      + sum(b.size * b.dtype.itemsize for b in biases))

    kernel = functools.partial(encoder_kernel, compute_dtype=compute_dtype)

    return pl.pallas_call(
        kernel,
        out_shape=jax.ShapeDtypeStruct((B, OUT_DIM), jnp.float32),
        grid=grid,
        in_specs=in_specs,
        out_specs=out_specs,
        compiler_params=pltpu.CompilerParams(
            dimension_semantics=("parallel",)),
        cost_estimate=pl.CostEstimate(
            flops=flops, transcendentals=0, bytes_accessed=bytes_accessed),
    )(*flat_args)


# -------------------------- parameter init -------------------------------- #
def init_params(key):
    """Deterministic init matching nn.Linear shapes (stored transposed)."""
    params = {}
    for i, (fan_in, fan_out) in enumerate(LAYER_DIMS, start=1):
        key, kw, kb = jax.random.split(key, 3)
        bound = 1.0 / jnp.sqrt(fan_in)
        # PyTorch Linear weight is (out, in); we store (in, out) = W.T.
        params[f"w{i}"] = jax.random.uniform(
            kw, (fan_in, fan_out), jnp.float32, -bound, bound)
        params[f"b{i}"] = jax.random.uniform(
            kb, (1, fan_out), jnp.float32, -bound, bound)
    return params


# --------------------------- reference (JAX) ------------------------------- #
def encoder_ref(x, params):
    h = x
    for i in range(1, 5):
        h = jnp.maximum(h @ params[f"w{i}"] + params[f"b{i}"], 0.0)
    return h @ params["w5"] + params["b5"]


if __name__ == "__main__":
    key = jax.random.PRNGKey(0)
    kx, kx2, kp = jax.random.split(key, 3)

    params = init_params(kp)

    # --- small shape consistent with the module: (batch, 6) features -------
    B = 8
    x = jax.random.normal(kx, (B, 6), jnp.float32)
    ref = encoder_ref(x, params)

    # f32 MXU path: tight tolerance vs the f32 reference.
    out_f32 = jax.block_until_ready(
        encoder_forward(x, params, use_bf16_matmul=False))
    assert out_f32.shape == (B, OUT_DIM), out_f32.shape
    assert jnp.allclose(out_f32, ref, atol=1e-5, rtol=1e-5), \
        "mismatch vs reference (B=8, f32)"

    # Default bf16 MXU path: looser tolerance (bf16 inputs, f32 accumulation).
    out_bf16 = jax.block_until_ready(encoder_forward(x, params))
    assert jnp.allclose(out_bf16, ref, atol=5e-2, rtol=5e-2), \
        "mismatch vs reference (B=8, bf16)"

    # --- exercise the batch grid: multiple tiles + ragged last block -------
    B2 = 300
    x2 = jax.random.normal(kx2, (B2, 6), jnp.float32)
    ref2 = encoder_ref(x2, params)

    out2_f32 = jax.block_until_ready(
        encoder_forward(x2, params, block_m=128, use_bf16_matmul=False))
    assert out2_f32.shape == (B2, OUT_DIM), out2_f32.shape
    assert jnp.allclose(out2_f32, ref2, atol=1e-5, rtol=1e-5), \
        "mismatch vs reference (B=300, f32, ragged grid)"

    out2_bf16 = jax.block_until_ready(encoder_forward(x2, params))
    assert jnp.allclose(out2_bf16, ref2, atol=5e-2, rtol=5e-2), \
        "mismatch vs reference (B=300, bf16, default tiling)"

    print("KERNEL_OK")
</pallas_src>

<mosaic_0001>
module attributes {stable_mosaic.version = 11 : i64} {
  func.func @encoder_kernel(%arg0: i32, %arg1: memref<8x6xf32, #tpu.memory_space<vmem>>, %arg2: memref<6x128xf32, #tpu.memory_space<vmem>>, %arg3: memref<1x128xf32, #tpu.memory_space<vmem>>, %arg4: memref<128x64xf32, #tpu.memory_space<vmem>>, %arg5: memref<1x64xf32, #tpu.memory_space<vmem>>, %arg6: memref<64x32xf32, #tpu.memory_space<vmem>>, %arg7: memref<1x32xf32, #tpu.memory_space<vmem>>, %arg8: memref<32x16xf32, #tpu.memory_space<vmem>>, %arg9: memref<1x16xf32, #tpu.memory_space<vmem>>, %arg10: memref<16x16xf32, #tpu.memory_space<vmem>>, %arg11: memref<1x16xf32, #tpu.memory_space<vmem>>, %arg12: memref<8x16xf32, #tpu.memory_space<vmem>>) attributes {dimension_semantics = [#tpu.dimension_semantics<parallel>], iteration_bounds = array<i64: 1>, scalar_prefetch = 0 : i64, scratch_operands = 0 : i64, tpu.core_type = #tpu.core_type<tc>, window_params = [{transform_indices = @transform_0, window_bounds = array<i64: 8, 6>}, {pipeline_mode = #tpu.pipeline_mode<synchronous>, transform_indices = @transform_1, window_bounds = array<i64: 6, 128>}, {pipeline_mode = #tpu.pipeline_mode<synchronous>, transform_indices = @transform_2, window_bounds = array<i64: 1, 128>}, {pipeline_mode = #tpu.pipeline_mode<synchronous>, transform_indices = @transform_3, window_bounds = array<i64: 128, 64>}, {pipeline_mode = #tpu.pipeline_mode<synchronous>, transform_indices = @transform_4, window_bounds = array<i64: 1, 64>}, {pipeline_mode = #tpu.pipeline_mode<synchronous>, transform_indices = @transform_5, window_bounds = array<i64: 64, 32>}, {pipeline_mode = #tpu.pipeline_mode<synchronous>, transform_indices = @transform_6, window_bounds = array<i64: 1, 32>}, {pipeline_mode = #tpu.pipeline_mode<synchronous>, transform_indices = @transform_7, window_bounds = array<i64: 32, 16>}, {pipeline_mode = #tpu.pipeline_mode<synchronous>, transform_indices = @transform_8, window_bounds = array<i64: 1, 16>}, {pipeline_mode = #tpu.pipeline_mode<synchronous>, transform_indices = @transform_9, window_bounds = array<i64: 16, 16>}, {pipeline_mode = #tpu.pipeline_mode<synchronous>, transform_indices = @transform_10, window_bounds = array<i64: 1, 16>}, {transform_indices = @transform_11, window_bounds = array<i64: 8, 16>}]} {
    %c0 = arith.constant 0 : index
    %c0_0 = arith.constant 0 : index
    %0 = vector.load %arg1[%c0, %c0_0] : memref<8x6xf32, #tpu.memory_space<vmem>>, vector<8x6xf32>
    %c0_1 = arith.constant 0 : index
    %c0_2 = arith.constant 0 : index
    %1 = vector.load %arg2[%c0_1, %c0_2] : memref<6x128xf32, #tpu.memory_space<vmem>>, vector<6x128xf32>
    %cst = arith.constant dense<0.000000e+00> : vector<8x128xf32>
    %2 = tpu.matmul %0, %1, %cst {dimension_numbers = #tpu.dot_dimension_numbers<[1], [0], [0], [1], [0, 0, 1, 1], [], []>} : vector<8x6xf32>, vector<6x128xf32>, vector<8x128xf32> -> vector<8x128xf32>
    %c0_3 = arith.constant 0 : index
    %c0_4 = arith.constant 0 : index
    %3 = vector.load %arg3[%c0_3, %c0_4] : memref<1x128xf32, #tpu.memory_space<vmem>>, vector<1x128xf32>
    %4 = vector.broadcast %3 : vector<1x128xf32> to vector<8x128xf32>
    %5 = arith.addf %2, %4 : vector<8x128xf32>
    %cst_5 = arith.constant 0.000000e+00 : f32
    %6 = vector.broadcast %cst_5 : f32 to vector<8x128xf32>
    %7 = arith.maximumf %5, %6 : vector<8x128xf32>
    %c0_6 = arith.constant 0 : index
    %c0_7 = arith.constant 0 : index
    %8 = vector.load %arg4[%c0_6, %c0_7] : memref<128x64xf32, #tpu.memory_space<vmem>>, vector<128x64xf32>
    %cst_8 = arith.constant dense<0.000000e+00> : vector<8x64xf32>
    %9 = tpu.matmul %7, %8, %cst_8 {dimension_numbers = #tpu.dot_dimension_numbers<[1], [0], [0], [1], [0, 0, 1, 1], [], []>} : vector<8x128xf32>, vector<128x64xf32>, vector<8x64xf32> -> vector<8x64xf32>
    %c0_9 = arith.constant 0 : index
    %c0_10 = arith.constant 0 : index
    %10 = vector.load %arg5[%c0_9, %c0_10] : memref<1x64xf32, #tpu.memory_space<vmem>>, vector<1x64xf32>
    %11 = vector.broadcast %10 : vector<1x64xf32> to vector<8x64xf32>
    %12 = arith.addf %9, %11 : vector<8x64xf32>
    %cst_11 = arith.constant 0.000000e+00 : f32
    %13 = vector.broadcast %cst_11 : f32 to vector<8x64xf32>
    %14 = arith.maximumf %12, %13 : vector<8x64xf32>
    %c0_12 = arith.constant 0 : index
    %c0_13 = arith.constant 0 : index
    %15 = vector.load %arg6[%c0_12, %c0_13] : memref<64x32xf32, #tpu.memory_space<vmem>>, vector<64x32xf32>
    %cst_14 = arith.constant dense<0.000000e+00> : vector<8x32xf32>
    %16 = tpu.matmul %14, %15, %cst_14 {dimension_numbers = #tpu.dot_dimension_numbers<[1], [0], [0], [1], [0, 0, 1, 1], [], []>} : vector<8x64xf32>, vector<64x32xf32>, vector<8x32xf32> -> vector<8x32xf32>
    %c0_15 = arith.constant 0 : index
    %c0_16 = arith.constant 0 : index
    %17 = vector.load %arg7[%c0_15, %c0_16] : memref<1x32xf32, #tpu.memory_space<vmem>>, vector<1x32xf32>
    %18 = vector.broadcast %17 : vector<1x32xf32> to vector<8x32xf32>
    %19 = arith.addf %16, %18 : vector<8x32xf32>
    %cst_17 = arith.constant 0.000000e+00 : f32
    %20 = vector.broadcast %cst_17 : f32 to vector<8x32xf32>
    %21 = arith.maximumf %19, %20 : vector<8x32xf32>
    %c0_18 = arith.constant 0 : index
    %c0_19 = arith.constant 0 : index
    %22 = vector.load %arg8[%c0_18, %c0_19] : memref<32x16xf32, #tpu.memory_space<vmem>>, vector<32x16xf32>
    %cst_20 = arith.constant dense<0.000000e+00> : vector<8x16xf32>
    %23 = tpu.matmul %21, %22, %cst_20 {dimension_numbers = #tpu.dot_dimension_numbers<[1], [0], [0], [1], [0, 0, 1, 1], [], []>} : vector<8x32xf32>, vector<32x16xf32>, vector<8x16xf32> -> vector<8x16xf32>
    %c0_21 = arith.constant 0 : index
    %c0_22 = arith.constant 0 : index
    %24 = vector.load %arg9[%c0_21, %c0_22] : memref<1x16xf32, #tpu.memory_space<vmem>>, vector<1x16xf32>
    %25 = vector.broadcast %24 : vector<1x16xf32> to vector<8x16xf32>
    %26 = arith.addf %23, %25 : vector<8x16xf32>
    %cst_23 = arith.constant 0.000000e+00 : f32
    %27 = vector.broadcast %cst_23 : f32 to vector<8x16xf32>
    %28 = arith.maximumf %26, %27 : vector<8x16xf32>
    %c0_24 = arith.constant 0 : index
    %c0_25 = arith.constant 0 : index
    %29 = vector.load %arg10[%c0_24, %c0_25] : memref<16x16xf32, #tpu.memory_space<vmem>>, vector<16x16xf32>
    %cst_26 = arith.constant dense<0.000000e+00> : vector<8x16xf32>
    %30 = tpu.matmul %28, %29, %cst_26 {dimension_numbers = #tpu.dot_dimension_numbers<[1], [0], [0], [1], [0, 0, 1, 1], [], []>} : vector<8x16xf32>, vector<16x16xf32>, vector<8x16xf32> -> vector<8x16xf32>
    %c0_27 = arith.constant 0 : index
    %c0_28 = arith.constant 0 : index
    %31 = vector.load %arg11[%c0_27, %c0_28] : memref<1x16xf32, #tpu.memory_space<vmem>>, vector<1x16xf32>
    %32 = vector.broadcast %31 : vector<1x16xf32> to vector<8x16xf32>
    %33 = arith.addf %30, %32 : vector<8x16xf32>
    %c0_29 = arith.constant 0 : index
    %c0_30 = arith.constant 0 : index
    %34 = vector.load %arg12[%c0_29, %c0_30] : memref<8x16xf32, #tpu.memory_space<vmem>>, vector<8x16xf32>
    tpu.vector_store %arg12[%c0_29, %c0_30], %33 {strides = array<i32>} : memref<8x16xf32, #tpu.memory_space<vmem>>, vector<8x16xf32>,
    return
  }
  func.func @transform_0(%arg0: i32) -> (i32, i32) {
    %c0_i32 = arith.constant 0 : i32
    %c0_i32_0 = arith.constant 0 : i32
    return %arg0, %c0_i32 : i32, i32
  }
  func.func @transform_1(%arg0: i32) -> (i32, i32) {
    %c0_i32 = arith.constant 0 : i32
    %c0_i32_0 = arith.constant 0 : i32
    %c0_i32_1 = arith.constant 0 : i32
    return %c0_i32, %c0_i32_0 : i32, i32
  }
  func.func @transform_2(%arg0: i32) -> (i32, i32) {
    %c0_i32 = arith.constant 0 : i32
    %c0_i32_0 = arith.constant 0 : i32
    %c0_i32_1 = arith.constant 0 : i32
    return %c0_i32, %c0_i32_0 : i32, i32
  }
  func.func @transform_3(%arg0: i32) -> (i32, i32) {
    %c0_i32 = arith.constant 0 : i32
    %c0_i32_0 = arith.constant 0 : i32
    %c0_i32_1 = arith.constant 0 : i32
    return %c0_i32, %c0_i32_0 : i32, i32
  }
  func.func @transform_4(%arg0: i32) -> (i32, i32) {
    %c0_i32 = arith.constant 0 : i32
    %c0_i32_0 = arith.constant 0 : i32
    %c0_i32_1 = arith.constant 0 : i32
    return %c0_i32, %c0_i32_0 : i32, i32
  }
  func.func @transform_5(%arg0: i32) -> (i32, i32) {
    %c0_i32 = arith.constant 0 : i32
    %c0_i32_0 = arith.constant 0 : i32
    %c0_i32_1 = arith.constant 0 : i32
    return %c0_i32, %c0_i32_0 : i32, i32
  }
  func.func @transform_6(%arg0: i32) -> (i32, i32) {
    %c0_i32 = arith.constant 0 : i32
    %c0_i32_0 = arith.constant 0 : i32
    %c0_i32_1 = arith.constant 0 : i32
    return %c0_i32, %c0_i32_0 : i32, i32
  }
  func.func @transform_7(%arg0: i32) -> (i32, i32) {
    %c0_i32 = arith.constant 0 : i32
    %c0_i32_0 = arith.constant 0 : i32
    %c0_i32_1 = arith.constant 0 : i32
    return %c0_i32, %c0_i32_0 : i32, i32
  }
  func.func @transform_8(%arg0: i32) -> (i32, i32) {
    %c0_i32 = arith.constant 0 : i32
    %c0_i32_0 = arith.constant 0 : i32
    %c0_i32_1 = arith.constant 0 : i32
    return %c0_i32, %c0_i32_0 : i32, i32
  }
  func.func @transform_9(%arg0: i32) -> (i32, i32) {
    %c0_i32 = arith.constant 0 : i32
    %c0_i32_0 = arith.constant 0 : i32
    %c0_i32_1 = arith.constant 0 : i32
    return %c0_i32, %c0_i32_0 : i32, i32
  }
  func.func @transform_10(%arg0: i32) -> (i32, i32) {
    %c0_i32 = arith.constant 0 : i32
    %c0_i32_0 = arith.constant 0 : i32
    %c0_i32_1 = arith.constant 0 : i32
    return %c0_i32, %c0_i32_0 : i32, i32
  }
  func.func @transform_11(%arg0: i32) -> (i32, i32) {
    %c0_i32 = arith.constant 0 : i32
    %c0_i32_0 = arith.constant 0 : i32
    return %arg0, %c0_i32 : i32, i32
  }
}

</mosaic_0001>

<llo_original>
// kernel: encoder_forward.1
$region0: #{encoder_forward.1}
  #allocation0 [shape = 'u32[]', space=smem, size = 0x4, offset = 0x4, fixed_abs, tag = 'smem constant byte address 0x4 - core index']
  #allocation1 [shape = 'u32[144,128]{1,0:T(1,128)}', space=vmem, size = 0x12000, scoped, tag = 'internal scratch']
  %s0 = inlined_call_operand.vmem [shape: f32[8,6], index: 0, kind: input, shape index: {}]
  %s1 = inlined_call_operand.vmem [shape: f32[6,128], index: 1, kind: input, shape index: {}]
  %s2 = inlined_call_operand.vmem [shape: f32[1,128], index: 2, kind: input, shape index: {}]
  %s3 = inlined_call_operand.vmem [shape: f32[128,64], index: 3, kind: input, shape index: {}]
  %s4 = inlined_call_operand.vmem [shape: f32[1,64], index: 4, kind: input, shape index: {}]
  %s5 = inlined_call_operand.vmem [shape: f32[64,32], index: 5, kind: input, shape index: {}]
  %s6 = inlined_call_operand.vmem [shape: f32[1,32], index: 6, kind: input, shape index: {}]
  %s7 = inlined_call_operand.vmem [shape: f32[32,16], index: 7, kind: input, shape index: {}]
  %s8 = inlined_call_operand.vmem [shape: f32[1,16], index: 8, kind: input, shape index: {}]
  %s9 = inlined_call_operand.vmem [shape: f32[16,16], index: 9, kind: input, shape index: {}]
  %s10 = inlined_call_operand.vmem [shape: f32[1,16], index: 10, kind: input, shape index: {}]
  %s11 = inlined_call_operand.hbm [shape: f32[8,16], index: 11, kind: output, shape index: {}]
  %s12 = sld [smem:[#allocation0]]
  $region54: #{encoder_forward.1} parent=0
    _
  %s14 = ssub.s32 1, %s12
  %s15 = scalar_select 0, %s14, %s12
  $region1: #{encoder_forward.1} parent=0
    #allocation2 [shape = 'u8[4096]{0}', space=vmem, size = 0x1000, scoped, tag = 'output window, operand 0, single buffered']
    #allocation3 [shape = 's32[1]{0}', space=sflag, size = 0x4, scoped, tag = 'scoped memory for encoder_forward.1']
    %16 = vsyncpa [#allocation3], 0
    // Predicated region
    $region2: #{encoder_forward.1} parent=1 // pred_check
      _
    $region3: #{encoder_forward.1} parent=1 // pred_check_branch
      %18 = sbr.rel (0) target = $region5
    $region4: #{encoder_forward.1} parent=1 // pred_region
      _
    $region5: #{encoder_forward.1} parent=1 // pred_fallthru
      _
    // Predicated region
    $region6: #{encoder_forward.1} parent=1 // pred_check
      _
    $region7: #{encoder_forward.1} parent=1 // pred_check_branch
      %20 = sbr.rel (0) target = $region9
    $region8: #{encoder_forward.1} parent=1 // pred_region
      _
    $region9: #{encoder_forward.1} parent=1 // pred_fallthru
      _
    // Predicated region
    $region10: #{encoder_forward.1} parent=1 // pred_check
      _
    $region11: #{encoder_forward.1} parent=1 // pred_check_branch
      %22 = sbr.rel (0) target = $region13
    $region12: #{encoder_forward.1} parent=1 // pred_region
      _
    $region13: #{encoder_forward.1} parent=1 // pred_fallthru
      _
    // Predicated region
    $region14: #{encoder_forward.1} parent=1 // pred_check
      _
    $region15: #{encoder_forward.1} parent=1 // pred_check_branch
      %24 = sbr.rel (0) target = $region17
    $region16: #{encoder_forward.1} parent=1 // pred_region
      _
    $region17: #{encoder_forward.1} parent=1 // pred_fallthru
      _
    // Predicated region
    $region18: #{encoder_forward.1} parent=1 // pred_check
      _
    $region19: #{encoder_forward.1} parent=1 // pred_check_branch
      %26 = sbr.rel (0) target = $region21
    $region20: #{encoder_forward.1} parent=1 // pred_region
      _
    $region21: #{encoder_forward.1} parent=1 // pred_fallthru
      _
    // Predicated region
    $region22: #{encoder_forward.1} parent=1 // pred_check
      _
    $region23: #{encoder_forward.1} parent=1 // pred_check_branch
      %28 = sbr.rel (0) target = $region25
    $region24: #{encoder_forward.1} parent=1 // pred_region
      _
    $region25: #{encoder_forward.1} parent=1 // pred_fallthru
      _
    // Predicated region
    $region26: #{encoder_forward.1} parent=1 // pred_check
      _
    $region27: #{encoder_forward.1} parent=1 // pred_check_branch
      %30 = sbr.rel (0) target = $region29
    $region28: #{encoder_forward.1} parent=1 // pred_region
      _
    $region29: #{encoder_forward.1} parent=1 // pred_fallthru
      _
    // Predicated region
    $region30: #{encoder_forward.1} parent=1 // pred_check
      _
    $region31: #{encoder_forward.1} parent=1 // pred_check_branch
      %32 = sbr.rel (0) target = $region33
    $region32: #{encoder_forward.1} parent=1 // pred_region
      _
    $region33: #{encoder_forward.1} parent=1 // pred_fallthru
      _
    // Predicated region
    $region34: #{encoder_forward.1} parent=1 // pred_check
      _
    $region35: #{encoder_forward.1} parent=1 // pred_check_branch
      %34 = sbr.rel (0) target = $region37
    $region36: #{encoder_forward.1} parent=1 // pred_region
      _
    $region37: #{encoder_forward.1} parent=1 // pred_fallthru
      _
    // Predicated region
    $region38: #{encoder_forward.1} parent=1 // pred_check
      _
    $region39: #{encoder_forward.1} parent=1 // pred_check_branch
      %36 = sbr.rel (0) target = $region41
    $region40: #{encoder_forward.1} parent=1 // pred_region
      _
    $region41: #{encoder_forward.1} parent=1 // pred_fallthru
      _
    // Predicated region
    $region42: #{encoder_forward.1} parent=1 // pred_check
      _
    $region43: #{encoder_forward.1} parent=1 // pred_check_branch
      %38 = sbr.rel (0) target = $region45
    $region44: #{encoder_forward.1} parent=1 // pred_region
      _
    $region45: #{encoder_forward.1} parent=1 // pred_fallthru
      _
    %v39 = vld [vmem:[%s0] sm:$0xff]
    %v40 = vld [vmem:[%s1] sm:$0x3f]
    %v41 = vld [vmem:[%s2] sm:$0x1]
    %v43 = vlaneseq
    %v44 = vshrl.u32 %v43, 7
    %v45 = vsub.s32 0, %v44
    %v46 = vrot.slane %v41, %v45
    %vm48 = vcmask 48128
    %v50 = vsel %vm48, %v39, 0
    %vm52 = vcmask 1045504
    %v54 = vsel %vm52, %v40, 0
    %56 = vmatprep.subr.mxu0 0.0
    %57 = vmatpush1.msra.mxu0 %v54
    %58 = vmatprep.subr.mxu0 0.0
    %59 = vmatpush1.msra.mxu0 0.0
    %60 = vmatprep.subr.mxu0 0.0
    %61 = vmatpush1.msra.mxu0 0.0
    %62 = vmatprep.subr.mxu0 0.0
    %63 = vmatpush1.msra.mxu0 0.0
    %64 = vmatprep.subr.mxu0 0.0
    %65 = vmatpush1.msra.mxu0 0.0
    %66 = vmatprep.subr.mxu0 0.0
    %67 = vmatpush1.msra.mxu0 0.0
    %68 = vmatprep.subr.mxu0 0.0
    %69 = vmatpush1.msra.mxu0 0.0
    %70 = vmatprep.subr.mxu0 0.0
    %71 = vmatpush1.msra.mxu0 0.0
    %72 = vmatprep.subr.mxu0 0.0
    %73 = vmatpush1.msra.mxu0 0.0
    %74 = vmatprep.subr.mxu0 0.0
    %75 = vmatpush1.msra.mxu0 0.0
    %76 = vmatprep.subr.mxu0 0.0
    %77 = vmatpush1.msra.mxu0 0.0
    %78 = vmatprep.subr.mxu0 0.0
    %79 = vmatpush1.msra.mxu0 0.0
    %80 = vmatprep.subr.mxu0 0.0
    %81 = vmatpush1.msra.mxu0 0.0
    %82 = vmatprep.subr.mxu0 0.0
    %83 = vmatpush1.msra.mxu0 0.0
    %84 = vmatprep.subr.mxu0 0.0
    %85 = vmatpush1.msra.mxu0 0.0
    %86 = vmatprep.subr.mxu0 0.0
    %87 = vmatpush1.msra.mxu0 0.0
    %88 = vmatprep.subr.mxu0 0.0
    %89 = vmatpush1.msra.mxu0 0.0
    %90 = vmatprep.subr.mxu0 0.0
    %91 = vmatpush1.msra.mxu0 0.0
    %92 = vmatprep.subr.mxu0 0.0
    %93 = vmatpush1.msra.mxu0 0.0
    %94 = vmatprep.subr.mxu0 0.0
    %95 = vmatpush1.msra.mxu0 0.0
    %96 = vmatprep.subr.mxu0 0.0
    %97 = vmatpush1.msra.mxu0 0.0
    %98 = vmatprep.subr.mxu0 0.0
    %99 = vmatpush1.msra.mxu0 0.0
    %100 = vmatprep.subr.mxu0 0.0
    %101 = vmatpush1.msra.mxu0 0.0
    %102 = vmatprep.subr.mxu0 0.0
    %103 = vmatpush1.msra.mxu0 0.0
    %104 = vmatprep.subr.mxu0 0.0
    %105 = vmatpush1.msra.mxu0 0.0
    %106 = vmatprep.subr.mxu0 0.0
    %107 = vmatpush1.msra.mxu0 0.0
    %108 = vmatprep.subr.mxu0 0.0
    %109 = vmatpush1.msra.mxu0 0.0
    %110 = vmatprep.subr.mxu0 0.0
    %111 = vmatpush1.msra.mxu0 0.0
    %112 = vmatprep.subr.mxu0 0.0
    %113 = vmatpush1.msra.mxu0 0.0
    %114 = vmatprep.subr.mxu0 0.0
    %115 = vmatpush1.msra.mxu0 0.0
    %116 = vmatprep.subr.mxu0 0.0
    %117 = vmatpush1.msra.mxu0 0.0
    %118 = vmatprep.subr.mxu0 0.0
    %119 = vmatpush1.msra.mxu0 0.0
    %120 = vmatprep.mubr.f32.mxu0 0.0
    %121 = vmatmul.mubr.f32.gmra.mrb[0].mxu0 %v50
    %v122 = vpop.f32.mrb[0].mxu0
    %v123 = vadd.f32 %v46, %v122
    %v124 = vpop.f32.mrb[0].mxu0
    %125 = vdwg.mxu0
    %v126 = vmax.f32 %v123, 0.0
    %v127 = vld [vmem:[%s3] sm:$0xff]
    %v128 = vld [vmem:[%s3 + $0x8] sm:$0xff]
    %v129 = vld [vmem:[%s3 + $0x10] sm:$0xff]
    %v130 = vld [vmem:[%s3 + $0x18] sm:$0xff]
    %v131 = vld [vmem:[%s3 + $0x20] sm:$0xff]
    %v132 = vld [vmem:[%s3 + $0x28] sm:$0xff]
    %v133 = vld [vmem:[%s3 + $0x30] sm:$0xff]
    %v134 = vld [vmem:[%s3 + $0x38] sm:$0xff]
    %v135 = vld [vmem:[%s3 + $0x40] sm:$0xff]
    %v136 = vld [vmem:[%s3 + $0x48] sm:$0xff]
    %v137 = vld [vmem:[%s3 + $0x50] sm:$0xff]
    %v138 = vld [vmem:[%s3 + $0x58] sm:$0xff]
    %v139 = vld [vmem:[%s3 + $0x60] sm:$0xff]
    %v140 = vld [vmem:[%s3 + $0x68] sm:$0xff]
    %v141 = vld [vmem:[%s3 + $0x70] sm:$0xff]
    %v142 = vld [vmem:[%s3 + $0x78] sm:$0xff]
    %v143 = vld [vmem:[%s4] sm:$0x1]
    %v145 = vlaneseq
    %v146 = vshrl.u32 %v145, 7
    %v147 = vsub.s32 0, %v146
    %v148 = vrot.slane %v143, %v147
    %150 = vmatprep.subr.mxu0 0.0
    %151 = vmatpush1.msra.mxu0 %v127
    %152 = vmatprep.subr.mxu0 0.0
    %153 = vmatpush1.msra.mxu0 %v128
    %154 = vmatprep.subr.mxu0 0.0
    %155 = vmatpush1.msra.mxu0 %v129
    %156 = vmatprep.subr.mxu0 0.0
    %157 = vmatpush1.msra.mxu0 %v130
    %158 = vmatprep.subr.mxu0 0.0
    %159 = vmatpush1.msra.mxu0 %v131
    %160 = vmatprep.subr.mxu0 0.0
    %161 = vmatpush1.msra.mxu0 %v132
    %162 = vmatprep.subr.mxu0 0.0
    %163 = vmatpush1.msra.mxu0 %v133
    %164 = vmatprep.subr.mxu0 0.0
    %165 = vmatpush1.msra.mxu0 %v134
    %166 = vmatprep.subr.mxu0 0.0
    %167 = vmatpush1.msra.mxu0 %v135
    %168 = vmatprep.subr.mxu0 0.0
    %169 = vmatpush1.msra.mxu0 %v136
    %170 = vmatprep.subr.mxu0 0.0
    %171 = vmatpush1.msra.mxu0 %v137
    %172 = vmatprep.subr.mxu0 0.0
    %173 = vmatpush1.msra.mxu0 %v138
    %174 = vmatprep.subr.mxu0 0.0
    %175 = vmatpush1.msra.mxu0 %v139
    %176 = vmatprep.subr.mxu0 0.0
    %177 = vmatpush1.msra.mxu0 %v140
    %178 = vmatprep.subr.mxu0 0.0
    %179 = vmatpush1.msra.mxu0 %v141
    %180 = vmatprep.subr.mxu0 0.0
    %181 = vmatpush1.msra.mxu0 %v142
    %182 = vmatprep.subr.mxu0 0.0
    %183 = vmatpush1.msra.mxu0 0.0
    %184 = vmatprep.subr.mxu0 0.0
    %185 = vmatpush1.msra.mxu0 0.0
    %186 = vmatprep.subr.mxu0 0.0
    %187 = vmatpush1.msra.mxu0 0.0
    %188 = vmatprep.subr.mxu0 0.0
    %189 = vmatpush1.msra.mxu0 0.0
    %190 = vmatprep.subr.mxu0 0.0
    %191 = vmatpush1.msra.mxu0 0.0
    %192 = vmatprep.subr.mxu0 0.0
    %193 = vmatpush1.msra.mxu0 0.0
    %194 = vmatprep.subr.mxu0 0.0
    %195 = vmatpush1.msra.mxu0 0.0
    %196 = vmatprep.subr.mxu0 0.0
    %197 = vmatpush1.msra.mxu0 0.0
    %198 = vmatprep.subr.mxu0 0.0
    %199 = vmatpush1.msra.mxu0 0.0
    %200 = vmatprep.subr.mxu0 0.0
    %201 = vmatpush1.msra.mxu0 0.0
    %202 = vmatprep.subr.mxu0 0.0
    %203 = vmatpush1.msra.mxu0 0.0
    %204 = vmatprep.subr.mxu0 0.0
    %205 = vmatpush1.msra.mxu0 0.0
    %206 = vmatprep.subr.mxu0 0.0
    %207 = vmatpush1.msra.mxu0 0.0
    %208 = vmatprep.subr.mxu0 0.0
    %209 = vmatpush1.msra.mxu0 0.0
    %210 = vmatprep.subr.mxu0 0.0
    %211 = vmatpush1.msra.mxu0 0.0
    %212 = vmatprep.subr.mxu0 0.0
    %213 = vmatpush1.msra.mxu0 0.0
    %214 = vmatprep.mubr.f32.mxu0 0.0
    %215 = vmatmul.mubr.f32.gmra.mrb[0].mxu0 %v126
    %v216 = vpop.f32.mrb[0].mxu0
    %v217 = vadd.f32 %v148, %v216
    %v218 = vpop.f32.mrb[0].mxu0
    %219 = vdwg.mxu0
    %v220 = vmax.f32 %v217, 0.0
    %v221 = vld [vmem:[%s5] sm:$0xff]
    %v222 = vld [vmem:[%s5 + $0x8] sm:$0xff]
    %v223 = vld [vmem:[%s5 + $0x10] sm:$0xff]
    %v224 = vld [vmem:[%s5 + $0x18] sm:$0xff]
    %v225 = vld [vmem:[%s5 + $0x20] sm:$0xff]
    %v226 = vld [vmem:[%s5 + $0x28] sm:$0xff]
    %v227 = vld [vmem:[%s5 + $0x30] sm:$0xff]
    %v228 = vld [vmem:[%s5 + $0x38] sm:$0xff]
    %v229 = vld [vmem:[%s6] sm:$0x1]
    %v231 = vlaneseq
    %v232 = vshrl.u32 %v231, 7
    %v233 = vsub.s32 0, %v232
    %v234 = vrot.slane %v229, %v233
    %vm236 = vcmask 523264
    %v238 = vsel %vm236, %v220, 0
    %240 = vmatprep.subr.mxu0 0.0
    %241 = vmatpush1.msra.mxu0 %v221
    %242 = vmatprep.subr.mxu0 0.0
    %243 = vmatpush1.msra.mxu0 %v222
    %244 = vmatprep.subr.mxu0 0.0
    %245 = vmatpush1.msra.mxu0 %v223
    %246 = vmatprep.subr.mxu0 0.0
    %247 = vmatpush1.msra.mxu0 %v224
    %248 = vmatprep.subr.mxu0 0.0
    %249 = vmatpush1.msra.mxu0 %v225
    %250 = vmatprep.subr.mxu0 0.0
    %251 = vmatpush1.msra.mxu0 %v226
    %252 = vmatprep.subr.mxu0 0.0
    %253 = vmatpush1.msra.mxu0 %v227
    %254 = vmatprep.subr.mxu0 0.0
    %255 = vmatpush1.msra.mxu0 %v228
    %256 = vmatprep.subr.mxu0 0.0
    %257 = vmatpush1.msra.mxu0 0.0
    %258 = vmatprep.subr.mxu0 0.0
    %259 = vmatpush1.msra.mxu0 0.0
    %260 = vmatprep.subr.mxu0 0.0
    %261 = vmatpush1.msra.mxu0 0.0
    %262 = vmatprep.subr.mxu0 0.0
    %263 = vmatpush1.msra.mxu0 0.0
    %264 = vmatprep.subr.mxu0 0.0
    %265 = vmatpush1.msra.mxu0 0.0
    %266 = vmatprep.subr.mxu0 0.0
    %267 = vmatpush1.msra.mxu0 0.0
    %268 = vmatprep.subr.mxu0 0.0
    %269 = vmatpush1.msra.mxu0 0.0
    %270 = vmatprep.subr.mxu0 0.0
    %271 = vmatpush1.msra.mxu0 0.0
    %272 = vmatprep.subr.mxu0 0.0
    %273 = vmatpush1.msra.mxu0 0.0
    %274 = vmatprep.subr.mxu0 0.0
    %275 = vmatpush1.msra.mxu0 0.0
    %276 = vmatprep.subr.mxu0 0.0
    %277 = vmatpush1.msra.mxu0 0.0
    %278 = vmatprep.subr.mxu0 0.0
    %279 = vmatpush1.msra.mxu0 0.0
    %280 = vmatprep.subr.mxu0 0.0
    %281 = vmatpush1.msra.mxu0 0.0
    %282 = vmatprep.subr.mxu0 0.0
    %283 = vmatpush1.msra.mxu0 0.0
    %284 = vmatprep.subr.mxu0 0.0
    %285 = vmatpush1.msra.mxu0 0.0
    %286 = vmatprep.subr.mxu0 0.0
    %287 = vmatpush1.msra.mxu0 0.0
    %288 = vmatprep.subr.mxu0 0.0
    %289 = vmatpush1.msra.mxu0 0.0
    %290 = vmatprep.subr.mxu0 0.0
    %291 = vmatpush1.msra.mxu0 0.0
    %292 = vmatprep.subr.mxu0 0.0
    %293 = vmatpush1.msra.mxu0 0.0
    %294 = vmatprep.subr.mxu0 0.0
    %295 = vmatpush1.msra.mxu0 0.0
    %296 = vmatprep.subr.mxu0 0.0
    %297 = vmatpush1.msra.mxu0 0.0
    %298 = vmatprep.subr.mxu0 0.0
    %299 = vmatpush1.msra.mxu0 0.0
    %300 = vmatprep.subr.mxu0 0.0
    %301 = vmatpush1.msra.mxu0 0.0
    %302 = vmatprep.subr.mxu0 0.0
    %303 = vmatpush1.msra.mxu0 0.0
    %304 = vmatprep.mubr.f32.mxu0 0.0
    %305 = vmatmul.mubr.f32.gmra.mrb[0].mxu0 %v238
    %v306 = vpop.f32.mrb[0].mxu0
    %v307 = vadd.f32 %v234, %v306
    %v308 = vpop.f32.mrb[0].mxu0
    %309 = vdwg.mxu0
    %v310 = vmax.f32 %v307, 0.0
    %v311 = vld [vmem:[%s7] sm:$0xff]
    %v312 = vld [vmem:[%s7 + $0x8] sm:$0xff]
    %v313 = vld [vmem:[%s7 + $0x10] sm:$0xff]
    %v314 = vld [vmem:[%s7 + $0x18] sm:$0xff]
    %v315 = vld [vmem:[%s8] sm:$0x1]
    %v317 = vlaneseq
    %v318 = vshrl.u32 %v317, 7
    %v319 = vsub.s32 0, %v318
    %v320 = vrot.slane %v315, %v319
    %vm322 = vcmask 261120
    %v324 = vsel %vm322, %v310, 0
    %326 = vmatprep.subr.mxu0 0.0
    %327 = vmatpush1.msra.mxu0 %v311
    %328 = vmatprep.subr.mxu0 0.0
    %329 = vmatpush1.msra.mxu0 %v312
    %330 = vmatprep.subr.mxu0 0.0
    %331 = vmatpush1.msra.mxu0 %v313
    %332 = vmatprep.subr.mxu0 0.0
    %333 = vmatpush1.msra.mxu0 %v314
    %334 = vmatprep.subr.mxu0 0.0
    %335 = vmatpush1.msra.mxu0 0.0
    %336 = vmatprep.subr.mxu0 0.0
    %337 = vmatpush1.msra.mxu0 0.0
    %338 = vmatprep.subr.mxu0 0.0
    %339 = vmatpush1.msra.mxu0 0.0
    %340 = vmatprep.subr.mxu0 0.0
    %341 = vmatpush1.msra.mxu0 0.0
    %342 = vmatprep.subr.mxu0 0.0
    %343 = vmatpush1.msra.mxu0 0.0
    %344 = vmatprep.subr.mxu0 0.0
    %345 = vmatpush1.msra.mxu0 0.0
    %346 = vmatprep.subr.mxu0 0.0
    %347 = vmatpush1.msra.mxu0 0.0
    %348 = vmatprep.subr.mxu0 0.0
    %349 = vmatpush1.msra.mxu0 0.0
    %350 = vmatprep.subr.mxu0 0.0
    %351 = vmatpush1.msra.mxu0 0.0
    %352 = vmatprep.subr.mxu0 0.0
    %353 = vmatpush1.msra.mxu0 0.0
    %354 = vmatprep.subr.mxu0 0.0
    %355 = vmatpush1.msra.mxu0 0.0
    %356 = vmatprep.subr.mxu0 0.0
    %357 = vmatpush1.msra.mxu0 0.0
    %358 = vmatprep.subr.mxu0 0.0
    %359 = vmatpush1.msra.mxu0 0.0
    %360 = vmatprep.subr.mxu0 0.0
    %361 = vmatpush1.msra.mxu0 0.0
    %362 = vmatprep.subr.mxu0 0.0
    %363 = vmatpush1.msra.mxu0 0.0
    %364 = vmatprep.subr.mxu0 0.0
    %365 = vmatpush1.msra.mxu0 0.0
    %366 = vmatprep.subr.mxu0 0.0
    %367 = vmatpush1.msra.mxu0 0.0
    %368 = vmatprep.subr.mxu0 0.0
    %369 = vmatpush1.msra.mxu0 0.0
    %370 = vmatprep.subr.mxu0 0.0
    %371 = vmatpush1.msra.mxu0 0.0
    %372 = vmatprep.subr.mxu0 0.0
    %373 = vmatpush1.msra.mxu0 0.0
    %374 = vmatprep.subr.mxu0 0.0
    %375 = vmatpush1.msra.mxu0 0.0
    %376 = vmatprep.subr.mxu0 0.0
    %377 = vmatpush1.msra.mxu0 0.0
    %378 = vmatprep.subr.mxu0 0.0
    %379 = vmatpush1.msra.mxu0 0.0
    %380 = vmatprep.subr.mxu0 0.0
    %381 = vmatpush1.msra.mxu0 0.0
    %382 = vmatprep.subr.mxu0 0.0
    %383 = vmatpush1.msra.mxu0 0.0
    %384 = vmatprep.subr.mxu0 0.0
    %385 = vmatpush1.msra.mxu0 0.0
    %386 = vmatprep.subr.mxu0 0.0
    %387 = vmatpush1.msra.mxu0 0.0
    %388 = vmatprep.subr.mxu0 0.0
    %389 = vmatpush1.msra.mxu0 0.0
    %390 = vmatprep.mubr.f32.mxu0 0.0
    %391 = vmatmul.mubr.f32.gmra.mrb[0].mxu0 %v324
    %v392 = vpop.f32.mrb[0].mxu0
    %v393 = vadd.f32 %v320, %v392
    %v394 = vpop.f32.mrb[0].mxu0
    %395 = vdwg.mxu0
    %v396 = vmax.f32 %v393, 0.0
    %v397 = vld [vmem:[%s9] sm:$0xff]
    %v398 = vld [vmem:[%s9 + $0x8] sm:$0xff]
    %v399 = vld [vmem:[%s10] sm:$0x1]
    %v401 = vlaneseq
    %v402 = vshrl.u32 %v401, 7
    %v403 = vsub.s32 0, %v402
    %v404 = vrot.slane %v399, %v403
    %vm406 = vcmask 130048
    %v408 = vsel %vm406, %v396, 0
    %410 = vmatprep.subr.mxu0 0.0
    %411 = vmatpush1.msra.mxu0 %v397
    %412 = vmatprep.subr.mxu0 0.0
    %413 = vmatpush1.msra.mxu0 %v398
    %414 = vmatprep.subr.mxu0 0.0
    %415 = vmatpush1.msra.mxu0 0.0
    %416 = vmatprep.subr.mxu0 0.0
    %417 = vmatpush1.msra.mxu0 0.0
    %418 = vmatprep.subr.mxu0 0.0
    %419 = vmatpush1.msra.mxu0 0.0
    %420 = vmatprep.subr.mxu0 0.0
    %421 = vmatpush1.msra.mxu0 0.0
    %422 = vmatprep.subr.mxu0 0.0
    %423 = vmatpush1.msra.mxu0 0.0
    %424 = vmatprep.subr.mxu0 0.0
    %425 = vmatpush1.msra.mxu0 0.0
    %426 = vmatprep.subr.mxu0 0.0
    %427 = vmatpush1.msra.mxu0 0.0
    %428 = vmatprep.subr.mxu0 0.0
    %429 = vmatpush1.msra.mxu0 0.0
    %430 = vmatprep.subr.mxu0 0.0
    %431 = vmatpush1.msra.mxu0 0.0
    %432 = vmatprep.subr.mxu0 0.0
    %433 = vmatpush1.msra.mxu0 0.0
    %434 = vmatprep.subr.mxu0 0.0
    %435 = vmatpush1.msra.mxu0 0.0
    %436 = vmatprep.subr.mxu0 0.0
    %437 = vmatpush1.msra.mxu0 0.0
    %438 = vmatprep.subr.mxu0 0.0
    %439 = vmatpush1.msra.mxu0 0.0
    %440 = vmatprep.subr.mxu0 0.0
    %441 = vmatpush1.msra.mxu0 0.0
    %442 = vmatprep.subr.mxu0 0.0
    %443 = vmatpush1.msra.mxu0 0.0
    %444 = vmatprep.subr.mxu0 0.0
    %445 = vmatpush1.msra.mxu0 0.0
    %446 = vmatprep.subr.mxu0 0.0
    %447 = vmatpush1.msra.mxu0 0.0
    %448 = vmatprep.subr.mxu0 0.0
    %449 = vmatpush1.msra.mxu0 0.0
    %450 = vmatprep.subr.mxu0 0.0
    %451 = vmatpush1.msra.mxu0 0.0
    %452 = vmatprep.subr.mxu0 0.0
    %453 = vmatpush1.msra.mxu0 0.0
    %454 = vmatprep.subr.mxu0 0.0
    %455 = vmatpush1.msra.mxu0 0.0
    %456 = vmatprep.subr.mxu0 0.0
    %457 = vmatpush1.msra.mxu0 0.0
    %458 = vmatprep.subr.mxu0 0.0
    %459 = vmatpush1.msra.mxu0 0.0
    %460 = vmatprep.subr.mxu0 0.0
    %461 = vmatpush1.msra.mxu0 0.0
    %462 = vmatprep.subr.mxu0 0.0
    %463 = vmatpush1.msra.mxu0 0.0
    %464 = vmatprep.subr.mxu0 0.0
    %465 = vmatpush1.msra.mxu0 0.0
    %466 = vmatprep.subr.mxu0 0.0
    %467 = vmatpush1.msra.mxu0 0.0
    %468 = vmatprep.subr.mxu0 0.0
    %469 = vmatpush1.msra.mxu0 0.0
    %470 = vmatprep.subr.mxu0 0.0
    %471 = vmatpush1.msra.mxu0 0.0
    %472 = vmatprep.subr.mxu0 0.0
    %473 = vmatpush1.msra.mxu0 0.0
    %474 = vmatprep.mubr.f32.mxu0 0.0
    %475 = vmatmul.mubr.f32.gmra.mrb[0].mxu0 %v408
    %v476 = vpop.f32.mrb[0].mxu0
    %v477 = vadd.f32 %v404, %v476
    %v478 = vpop.f32.mrb[0].mxu0
    %479 = vdwg.mxu0
    %480 = vst.msk [vmem:[#allocation2] sm:$0xff] %vm406, %v477
    // Predicated region
    $region46: #{encoder_forward.1} parent=1 // pred_check
      _
    $region47: #{encoder_forward.1} parent=1 // pred_check_branch
      %482 = sbr.rel (0) target = $region49
    $region48: #{encoder_forward.1} parent=1 // pred_region
      %s484 = ssub.s32 128, 128
      %485 = vsyncadd [#allocation3], %s484
      %s487 = sshll.u32 [#allocation2], 4
      %s488 = int_to_ptr.vmem [resolvable:$true] %s487
      %490 = dma.vmem_to_hbm [thread:$0]  %s488, 128, %s11, [#allocation3]
    $region49: #{encoder_forward.1} parent=1 // pred_fallthru
      _
    // Predicated region
    $region50: #{encoder_forward.1} parent=1 // pred_check
      _
    $region51: #{encoder_forward.1} parent=1 // pred_check_branch
      %492 = sbr.rel (0) target = $region53
    $region52: #{encoder_forward.1} parent=1 // pred_region
      %493 = dma.done [#allocation3], 128
    $region53: #{encoder_forward.1} parent=1 // pred_fallthru
      _
    %494 = vsyncpa [#allocation3], 1

</llo_original>
